<compile_context>
chip_gen: v7x
topology: tpu7x:2x2x1
jax: 0.10.0
libtpu: 0.0.40
codegen_flags: <defaults>
</compile_context>

<pallas_src>
import functools

import jax
import jax.numpy as jnp
from jax import lax
from jax.experimental import pallas as pl
from jax.experimental.pallas import tpu as pltpu


def _round_up(n, m):
    return ((n + m - 1) // m) * m


def _pad_to(a, shape):
    pads = [(0, t - s) for s, t in zip(a.shape, shape)]
    if all(p == (0, 0) for p in pads):
        return a
    return jnp.pad(a, pads)


def _alphazero_kernel(x_ref, w_in_ref, b_in_ref, hw_ref, hb_ref,
                      w_hd_ref, b_hd_ref, head_ref, h_scr,
                      *, value_col, head_cols):
    """Grid = (batch_tiles, num_hidden_layers).  One hidden layer per step.

    Step l == 0 additionally runs the input layer; step l == last additionally
    runs the fused policy+value head.  The running activation lives in the
    f32 VMEM scratch `h_scr`; matmul operands use the weights' dtype (bf16 by
    default) with f32 MXU accumulation.
    """
    l = pl.program_id(1)
    last = pl.num_programs(1) - 1

    # Input layer + ReLU (initializes the activation scratch for this tile).
    @pl.when(l == 0)
    def _input_layer():
        h0 = jnp.dot(x_ref[...], w_in_ref[...],
                     preferred_element_type=jnp.float32)
        h_scr[...] = jnp.maximum(h0 + b_in_ref[...].astype(jnp.float32), 0.0)

    # Hidden layer l: Linear + ReLU.  Weight block streamed per grid step;
    # all hidden biases are resident in VMEM and indexed by l.
    w = hw_ref[0]                                   # (H_p, H_p)
    b = hb_ref[l].astype(jnp.float32)               # (1, H_p)
    y = jnp.dot(h_scr[...].astype(w.dtype), w,
                preferred_element_type=jnp.float32) + b
    h_scr[...] = jnp.maximum(y, 0.0)

    # Fused policy + value head (single lane-dense matmul, lane-dense stores).
    @pl.when(l == last)
    def _heads():
        w_hd = w_hd_ref[...]                        # (H_p, HEAD_p)
        hd = jnp.dot(h_scr[...].astype(w_hd.dtype), w_hd,
                     preferred_element_type=jnp.float32)
        hd = hd + b_hd_ref[...].astype(jnp.float32)
        # The value column (index == num_actions) always lies in the final
        # 128-lane block of the padded head, so only that block needs the
        # EUP tanh + VPU select; everything else is stored untouched.
        c = head_cols - 128
        if c > 0:
            head_ref[:, :c] = hd[:, :c]
        tail = hd[:, c:]
        lane = lax.broadcasted_iota(jnp.int32, tail.shape, 1) + c
        head_ref[:, c:] = jnp.where(lane == value_col, jnp.tanh(tail), tail)


def _choose_batch_tile(B, batch_tile):
    """16-sublane-aligned batch tile (bf16 min tile); >=2 tiles when B > 256."""
    sub = 16
    if batch_tile is not None:
        return max(sub, _round_up(batch_tile, sub))
    if B <= 256:
        return _round_up(B, sub)
    # At least two batch tiles so the "parallel" axis can shard across v7x's
    # two TensorCores; cap per-tile rows at 512 (amortizes weight re-streaming
    # on v6e/v7x while keeping h_scr / out tiles small).
    half = -(-B // 2)
    return min(512, _round_up(half, 128))


def _vmem_limit_bytes(TB, IN_p, H_p, HEAD_p, L, p_item):
    footprint = (
        2 * TB * IN_p * p_item        # x tile        (double-buffered)
        + IN_p * H_p * p_item         # w_in          (single, invariant)
        + H_p * 4                     # b_in
        + 2 * H_p * H_p * p_item      # hw[l]         (double-buffered)
        + L * H_p * 4                 # hb            (resident, all layers)
        + H_p * HEAD_p * p_item       # w_head        (single, invariant)
        + HEAD_p * 4                  # b_head
        + 2 * TB * HEAD_p * 4         # out tile      (double-buffered)
        + TB * H_p * 4                # h_scr
    )
    limit = int(footprint * 3 // 2) + (2 << 20)
    return max(16 << 20, min(limit, 127 << 20))


def alphazero_net_forward(x, params, *, batch_tile=None,
                          param_dtype=jnp.bfloat16):
    """AlphaZeroNet forward in one Pallas call.

    x: (B, input_dim) float32
    params: (w_in, b_in, hw, hb, wp, bp, wv, bv) with weights in (in, out)
            layout (already transposed from PyTorch's (out, in)).
    returns: (policy_logits (B, num_actions) f32, value (B,) f32)
    """
    w_in, b_in, hw, hb, wp, bp, wv, bv = params
    B, IN = x.shape
    H = w_in.shape[1]
    A = wp.shape[1]
    L = hw.shape[0]
    assert L >= 1, "need at least one hidden layer"

    f32 = jnp.float32
    p_item = jnp.dtype(param_dtype).itemsize
    IN_p = _round_up(IN, 128)
    H_p = _round_up(H, 128)
    HEAD = A + 1                                   # fused policy (A) + value (1)
    HEAD_p = _round_up(HEAD, 128)

    TB = _choose_batch_tile(B, batch_tile)
    B_p = _round_up(max(B, TB), TB)
    grid_b = B_p // TB

    # ---- pad / pack params (zero padding is exact for a ReLU MLP) ----
    x_p = _pad_to(x.astype(param_dtype), (B_p, IN_p))
    w_in_p = _pad_to(w_in.astype(param_dtype), (IN_p, H_p))
    b_in_p = _pad_to(b_in.astype(f32).reshape(1, H), (1, H_p))
    hw_p = _pad_to(hw.astype(param_dtype), (L, H_p, H_p))
    hb_p = _pad_to(hb.astype(f32).reshape(L, 1, H), (L, 1, H_p))
    w_hd = jnp.concatenate([wp, wv], axis=1)                  # (H, A+1)
    b_hd = jnp.concatenate([bp.reshape(A), bv.reshape(1)]).reshape(1, HEAD)
    w_hd_p = _pad_to(w_hd.astype(param_dtype), (H_p, HEAD_p))
    b_hd_p = _pad_to(b_hd.astype(f32), (1, HEAD_p))

    kernel = functools.partial(_alphazero_kernel, value_col=A,
                               head_cols=HEAD_p)

    # ---- cost model (advisory) ----
    flops = 2 * B_p * (IN_p * H_p + L * H_p * H_p + H_p * HEAD_p)
    weight_bytes = (w_in_p.size * p_item + hw_p.size * p_item
                    + w_hd_p.size * p_item
                    + (b_in_p.size + hb_p.size + b_hd_p.size) * 4)
    bytes_accessed = int(grid_b * weight_bytes           # weights re-read per tile
                         + x_p.size * p_item
                         + B_p * HEAD_p * 4)
    transcendentals = int(B_p * 128)                      # tanh on last lane block

    # Grid-invariant blocks: a second pipeline buffer is pure VMEM waste.
    single = pl.Buffered(1)

    head_out = pl.pallas_call(
        kernel,
        out_shape=jax.ShapeDtypeStruct((B_p, HEAD_p), jnp.float32),
        grid_spec=pltpu.PrefetchScalarGridSpec(
            num_scalar_prefetch=0,
            grid=(grid_b, L),
            in_specs=[
                pl.BlockSpec((TB, IN_p), lambda i, l: (i, 0)),          # x
                pl.BlockSpec((IN_p, H_p), lambda i, l: (0, 0),
                             pipeline_mode=single),                     # w_in
                pl.BlockSpec((1, H_p), lambda i, l: (0, 0),
                             pipeline_mode=single),                     # b_in
                pl.BlockSpec((1, H_p, H_p), lambda i, l: (l, 0, 0)),    # hw[l]
                pl.BlockSpec((L, 1, H_p), lambda i, l: (0, 0, 0),
                             pipeline_mode=single),                     # hb (all)
                pl.BlockSpec((H_p, HEAD_p), lambda i, l: (0, 0),
                             pipeline_mode=single),                     # w_head
                pl.BlockSpec((1, HEAD_p), lambda i, l: (0, 0),
                             pipeline_mode=single),                     # b_head
            ],
            out_specs=pl.BlockSpec((TB, HEAD_p), lambda i, l: (i, 0)),
            scratch_shapes=[pltpu.VMEM((TB, H_p), jnp.float32)],        # h
        ),
        compiler_params=pltpu.CompilerParams(
            dimension_semantics=("parallel", "arbitrary"),
            vmem_limit_bytes=_vmem_limit_bytes(TB, IN_p, H_p, HEAD_p, L,
                                               p_item)),
        cost_estimate=pl.CostEstimate(
            flops=int(flops),
            transcendentals=transcendentals,
            bytes_accessed=bytes_accessed),
    )(x_p, w_in_p, b_in_p, hw_p, hb_p, w_hd_p, b_hd_p)

    policy = head_out[:B, :A]          # raw logits
    value = head_out[:B, A]            # tanh already applied in kernel
    return policy, value


def init_params(key, input_dim, hidden_dim, num_actions, num_layers):
    """Deterministic synthetic params; weights stored as (in, out), biases 1-D."""
    keys = jax.random.split(key, 8)
    s = 0.1
    w_in = s * jax.random.normal(keys[0], (input_dim, hidden_dim), jnp.float32)
    b_in = s * jax.random.normal(keys[1], (hidden_dim,), jnp.float32)
    hw = s * jax.random.normal(keys[2], (num_layers, hidden_dim, hidden_dim),
                               jnp.float32)
    hb = s * jax.random.normal(keys[3], (num_layers, hidden_dim), jnp.float32)
    wp = s * jax.random.normal(keys[4], (hidden_dim, num_actions), jnp.float32)
    bp = s * jax.random.normal(keys[5], (num_actions,), jnp.float32)
    wv = s * jax.random.normal(keys[6], (hidden_dim, 1), jnp.float32)
    bv = s * jax.random.normal(keys[7], (1,), jnp.float32)
    return (w_in, b_in, hw, hb, wp, bp, wv, bv)


def reference_forward(x, params):
    """Plain-JAX f32 reference mirroring the PyTorch module."""
    w_in, b_in, hw, hb, wp, bp, wv, bv = params
    h = jax.nn.relu(x @ w_in + b_in)
    for i in range(hw.shape[0]):
        h = jax.nn.relu(h @ hw[i] + hb[i])
    policy = h @ wp + bp
    value = jnp.tanh(h @ wv + bv)
    return policy, value[:, 0]


if __name__ == "__main__":
    # Small shapes consistent with the module's forward.
    batch = 8
    input_dim = 16
    hidden_dim = 32
    num_actions = 8
    num_layers = 10

    key = jax.random.PRNGKey(0)
    k_x, k_p = jax.random.split(key)
    x = jax.random.normal(k_x, (batch, input_dim), jnp.float32)
    params = init_params(k_p, input_dim, hidden_dim, num_actions, num_layers)

    ref_policy, ref_value = reference_forward(x, params)

    # Default path: bf16 operands, f32 accumulation.
    policy, value = alphazero_net_forward(x, params)
    jax.block_until_ready((policy, value))
    assert policy.shape == (batch, num_actions)
    assert value.shape == (batch,)
    assert jnp.allclose(policy, ref_policy, atol=5e-2, rtol=5e-2)
    assert jnp.allclose(value, ref_value, atol=5e-2, rtol=5e-2)

    # Full-f32 path must match the f32 reference tightly.
    policy32, value32 = alphazero_net_forward(x, params,
                                              param_dtype=jnp.float32)
    jax.block_until_ready((policy32, value32))
    assert jnp.allclose(policy32, ref_policy, atol=1e-4, rtol=1e-4)
    assert jnp.allclose(value32, ref_value, atol=1e-4, rtol=1e-4)

    print("KERNEL_OK")
</pallas_src>

<mosaic_0001>
module attributes {stable_mosaic.version = 11 : i64} {
  func.func @_alphazero_kernel(%arg0: i32, %arg1: i32, %arg2: memref<16x128xbf16, #tpu.memory_space<vmem>>, %arg3: memref<128x128xbf16, #tpu.memory_space<vmem>>, %arg4: memref<1x128xf32, #tpu.memory_space<vmem>>, %arg5: memref<1x128x128xbf16, #tpu.memory_space<vmem>>, %arg6: memref<10x1x128xf32, #tpu.memory_space<vmem>>, %arg7: memref<128x128xbf16, #tpu.memory_space<vmem>>, %arg8: memref<1x128xf32, #tpu.memory_space<vmem>>, %arg9: memref<16x128xf32, #tpu.memory_space<vmem>>, %arg10: memref<16x128xf32, #tpu.memory_space<vmem>>) attributes {dimension_semantics = [#tpu.dimension_semantics<parallel>, #tpu.dimension_semantics<arbitrary>], iteration_bounds = array<i64: 1, 10>, scalar_prefetch = 0 : i64, scratch_operands = 1 : i64, tpu.core_type = #tpu.core_type<tc>, window_params = [{transform_indices = @transform_0, window_bounds = array<i64: 16, 128>}, {pipeline_mode = #tpu.pipeline_mode<synchronous>, transform_indices = @transform_1, window_bounds = array<i64: 128, 128>}, {pipeline_mode = #tpu.pipeline_mode<synchronous>, transform_indices = @transform_2, window_bounds = array<i64: 1, 128>}, {transform_indices = @transform_3, window_bounds = array<i64: 1, 128, 128>}, {pipeline_mode = #tpu.pipeline_mode<synchronous>, transform_indices = @transform_4, window_bounds = array<i64: 10, 1, 128>}, {pipeline_mode = #tpu.pipeline_mode<synchronous>, transform_indices = @transform_5, window_bounds = array<i64: 128, 128>}, {pipeline_mode = #tpu.pipeline_mode<synchronous>, transform_indices = @transform_6, window_bounds = array<i64: 1, 128>}, {transform_indices = @transform_7, window_bounds = array<i64: 16, 128>}]} {
    %c0_i32 = arith.constant 0 : i32
    %0 = arith.cmpi eq, %arg1, %c0_i32 : i32
    %1 = arith.extui %0 : i1 to i32
    %c0_i32_0 = arith.constant 0 : i32
    %2 = arith.cmpi ne, %1, %c0_i32_0 : i32
    scf.if %2 {
      %c0_11 = arith.constant 0 : index
      %c0_12 = arith.constant 0 : index
      %19 = vector.load %arg2[%c0_11, %c0_12] : memref<16x128xbf16, #tpu.memory_space<vmem>>, vector<16x128xbf16>
      %c0_13 = arith.constant 0 : index
      %c0_14 = arith.constant 0 : index
      %20 = vector.load %arg3[%c0_13, %c0_14] : memref<128x128xbf16, #tpu.memory_space<vmem>>, vector<128x128xbf16>
      %cst_15 = arith.constant dense<0.000000e+00> : vector<16x128xf32>
      %21 = tpu.matmul %19, %20, %cst_15 {dimension_numbers = #tpu.dot_dimension_numbers<[1], [0], [0], [1], [0, 0, 1, 1], [], []>} : vector<16x128xbf16>, vector<128x128xbf16>, vector<16x128xf32> -> vector<16x128xf32>
      %c0_16 = arith.constant 0 : index
      %c0_17 = arith.constant 0 : index
      %22 = vector.load %arg4[%c0_16, %c0_17] : memref<1x128xf32, #tpu.memory_space<vmem>>, vector<1x128xf32>
      %23 = vector.broadcast %22 : vector<1x128xf32> to vector<16x128xf32>
      %24 = arith.addf %21, %23 : vector<16x128xf32>
      %cst_18 = arith.constant 0.000000e+00 : f32
      %25 = vector.broadcast %cst_18 : f32 to vector<16x128xf32>
      %26 = arith.maximumf %24, %25 : vector<16x128xf32>
      %c0_19 = arith.constant 0 : index
      %c0_20 = arith.constant 0 : index
      %27 = vector.load %arg10[%c0_19, %c0_20] : memref<16x128xf32, #tpu.memory_space<vmem>>, vector<16x128xf32>
      tpu.vector_store %arg10[%c0_19, %c0_20], %26 {strides = array<i32>} : memref<16x128xf32, #tpu.memory_space<vmem>>, vector<16x128xf32>,
    } else {
    }
    %c0 = arith.constant 0 : index
    %c0_1 = arith.constant 0 : index
    %c0_2 = arith.constant 0 : index
    %3 = vector.load %arg5[%c0, %c0_1, %c0_2] : memref<1x128x128xbf16, #tpu.memory_space<vmem>>, vector<1x128x128xbf16>
    %4 = vector.shape_cast %3 : vector<1x128x128xbf16> to vector<128x128xbf16>
    %5 = arith.index_cast %arg1 : i32 to index
    %c0_3 = arith.constant 0 : index
    %c0_4 = arith.constant 0 : index
    %6 = vector.load %arg6[%5, %c0_3, %c0_4] : memref<10x1x128xf32, #tpu.memory_space<vmem>>, vector<1x1x128xf32>
    %7 = vector.shape_cast %6 : vector<1x1x128xf32> to vector<1x128xf32>
    %c0_5 = arith.constant 0 : index
    %c0_6 = arith.constant 0 : index
    %8 = vector.load %arg10[%c0_5, %c0_6] : memref<16x128xf32, #tpu.memory_space<vmem>>, vector<16x128xf32>
    %9 = arith.truncf %8 : vector<16x128xf32> to vector<16x128xbf16>
    %cst = arith.constant dense<0.000000e+00> : vector<16x128xf32>
    %10 = tpu.matmul %9, %4, %cst {dimension_numbers = #tpu.dot_dimension_numbers<[1], [0], [0], [1], [0, 0, 1, 1], [], []>} : vector<16x128xbf16>, vector<128x128xbf16>, vector<16x128xf32> -> vector<16x128xf32>
    %11 = vector.broadcast %7 : vector<1x128xf32> to vector<16x128xf32>
    %12 = arith.addf %10, %11 : vector<16x128xf32>
    %cst_7 = arith.constant 0.000000e+00 : f32
    %13 = vector.broadcast %cst_7 : f32 to vector<16x128xf32>
    %14 = arith.maximumf %12, %13 : vector<16x128xf32>
    %c0_8 = arith.constant 0 : index
    %c0_9 = arith.constant 0 : index
    %15 = vector.load %arg10[%c0_8, %c0_9] : memref<16x128xf32, #tpu.memory_space<vmem>>, vector<16x128xf32>
    tpu.vector_store %arg10[%c0_8, %c0_9], %14 {strides = array<i32>} : memref<16x128xf32, #tpu.memory_space<vmem>>, vector<16x128xf32>,
    %c9_i32 = arith.constant 9 : i32
    %16 = arith.cmpi eq, %arg1, %c9_i32 : i32
    %17 = arith.extui %16 : i1 to i32
    %c0_i32_10 = arith.constant 0 : i32
    %18 = arith.cmpi ne, %17, %c0_i32_10 : i32
    scf.if %18 {
      %c0_11 = arith.constant 0 : index
      %c0_12 = arith.constant 0 : index
      %19 = vector.load %arg7[%c0_11, %c0_12] : memref<128x128xbf16, #tpu.memory_space<vmem>>, vector<128x128xbf16>
      %c0_13 = arith.constant 0 : index
      %c0_14 = arith.constant 0 : index
      %20 = vector.load %arg10[%c0_13, %c0_14] : memref<16x128xf32, #tpu.memory_space<vmem>>, vector<16x128xf32>
      %21 = arith.truncf %20 : vector<16x128xf32> to vector<16x128xbf16>
      %cst_15 = arith.constant dense<0.000000e+00> : vector<16x128xf32>
      %22 = tpu.matmul %21, %19, %cst_15 {dimension_numbers = #tpu.dot_dimension_numbers<[1], [0], [0], [1], [0, 0, 1, 1], [], []>} : vector<16x128xbf16>, vector<128x128xbf16>, vector<16x128xf32> -> vector<16x128xf32>
      %c0_16 = arith.constant 0 : index
      %c0_17 = arith.constant 0 : index
      %23 = vector.load %arg8[%c0_16, %c0_17] : memref<1x128xf32, #tpu.memory_space<vmem>>, vector<1x128xf32>
      %24 = vector.broadcast %23 : vector<1x128xf32> to vector<16x128xf32>
      %25 = arith.addf %22, %24 : vector<16x128xf32>
      %26 = tpu.iota {dimensions = array<i32: 1>} : vector<16x128xi32>
      %c0_i32_18 = arith.constant 0 : i32
      %27 = vector.broadcast %c0_i32_18 : i32 to vector<16x128xi32>
      %28 = arith.addi %26, %27 : vector<16x128xi32>
      %c8_i32 = arith.constant 8 : i32
      %29 = vector.broadcast %c8_i32 : i32 to vector<16x128xi32>
      %30 = arith.cmpi eq, %28, %29 : vector<16x128xi32>
      %31 = math.tanh %25 : vector<16x128xf32>
      %32 = arith.select %30, %31, %25 : vector<16x128xi1>, vector<16x128xf32>
      %c0_19 = arith.constant 0 : index
      %c0_20 = arith.constant 0 : index
      %33 = vector.load %arg9[%c0_19, %c0_20] : memref<16x128xf32, #tpu.memory_space<vmem>>, vector<16x128xf32>
      tpu.vector_store %arg9[%c0_19, %c0_20], %32 {strides = array<i32>} : memref<16x128xf32, #tpu.memory_space<vmem>>, vector<16x128xf32>,
    } else {
    }
    return
  }
  func.func @transform_0(%arg0: i32, %arg1: i32) -> (i32, i32) {
    %c0_i32 = arith.constant 0 : i32
    %c0_i32_0 = arith.constant 0 : i32
    return %arg0, %c0_i32 : i32, i32
  }
  func.func @transform_1(%arg0: i32, %arg1: i32) -> (i32, i32) {
    %c0_i32 = arith.constant 0 : i32
    %c0_i32_0 = arith.constant 0 : i32
    %c0_i32_1 = arith.constant 0 : i32
    return %c0_i32, %c0_i32_0 : i32, i32
  }
  func.func @transform_2(%arg0: i32, %arg1: i32) -> (i32, i32) {
    %c0_i32 = arith.constant 0 : i32
    %c0_i32_0 = arith.constant 0 : i32
    %c0_i32_1 = arith.constant 0 : i32
    return %c0_i32, %c0_i32_0 : i32, i32
  }
  func.func @transform_3(%arg0: i32, %arg1: i32) -> (i32, i32, i32) {
    %c0_i32 = arith.constant 0 : i32
    %c0_i32_0 = arith.constant 0 : i32
    %c0_i32_1 = arith.constant 0 : i32
    return %arg1, %c0_i32, %c0_i32_0 : i32, i32, i32
  }
  func.func @transform_4(%arg0: i32, %arg1: i32) -> (i32, i32, i32) {
    %c0_i32 = arith.constant 0 : i32
    %c0_i32_0 = arith.constant 0 : i32
    %c0_i32_1 = arith.constant 0 : i32
    %c0_i32_2 = arith.constant 0 : i32
    return %c0_i32, %c0_i32_0, %c0_i32_1 : i32, i32, i32
  }
  func.func @transform_5(%arg0: i32, %arg1: i32) -> (i32, i32) {
    %c0_i32 = arith.constant 0 : i32
    %c0_i32_0 = arith.constant 0 : i32
    %c0_i32_1 = arith.constant 0 : i32
    return %c0_i32, %c0_i32_0 : i32, i32
  }
  func.func @transform_6(%arg0: i32, %arg1: i32) -> (i32, i32) {
    %c0_i32 = arith.constant 0 : i32
    %c0_i32_0 = arith.constant 0 : i32
    %c0_i32_1 = arith.constant 0 : i32
    return %c0_i32, %c0_i32_0 : i32, i32
  }
  func.func @transform_7(%arg0: i32, %arg1: i32) -> (i32, i32) {
    %c0_i32 = arith.constant 0 : i32
    %c0_i32_0 = arith.constant 0 : i32
    return %arg0, %c0_i32 : i32, i32
  }
}

</mosaic_0001>

<llo_original>
// kernel: tpu_custom_call.1
$region0: #{tpu_custom_call.1}
  #allocation0 [shape = 'u32[]', space=smem, size = 0x4, offset = 0x4, fixed_abs, tag = 'smem constant byte address 0x4 - core index']
  #allocation1 [shape = 'u32[144,128]{1,0:T(1,128)}', space=vmem, size = 0x12000, scoped, tag = 'internal scratch']
  #allocation2 [shape = 'f32[16,128]{1,0:T(8,128)}', space=vmem, size = 0x2000, scoped, tag = 'scratch operand']
  %s0 = inlined_call_operand.hbm [shape: bf16[16,128], index: 0, kind: input, shape index: {}]
  %s1 = inlined_call_operand.hbm [shape: bf16[128,128], index: 1, kind: input, shape index: {}]
  %s2 = inlined_call_operand.vmem [shape: f32[1,128], index: 2, kind: input, shape index: {}]
  %s3 = inlined_call_operand.hbm [shape: bf16[10,128,128], index: 3, kind: input, shape index: {}]
  %s4 = inlined_call_operand.vmem [shape: f32[10,1,128], index: 4, kind: input, shape index: {}]
  %s5 = inlined_call_operand.hbm [shape: bf16[128,128], index: 5, kind: input, shape index: {}]
  %s6 = inlined_call_operand.vmem [shape: f32[1,128], index: 6, kind: input, shape index: {}]
  %s7 = inlined_call_operand.hbm [shape: f32[16,128], index: 7, kind: output, shape index: {}]
  %s8 = sld [smem:[#allocation0]]
  $region85: #{tpu_custom_call.1} parent=0
    _
  %s10 = ssub.s32 1, %s8
  %s11 = scalar_select 0, %s10, %s8
  $region1: #{tpu_custom_call.1} parent=0
    #allocation3 [shape = 'u8[4096]{0}', space=vmem, size = 0x1000, scoped, tag = 'input window, operand 0, single buffered']
    #allocation4 [shape = 's32[2]{0}', space=sflag, size = 0x8, scoped, tag = 'scoped memory for tpu_custom_call.1']
    #allocation5 [shape = 's32[2]{0}', space=sflag, size = 0x8, scoped, tag = 'scoped memory for tpu_custom_call.1']
    #allocation6 [shape = 'u8[32768]{0}', space=vmem, size = 0x8000, scoped, tag = 'input window, operand 1, single buffered']
    #allocation7 [shape = 's32[1]{0}', space=sflag, size = 0x4, scoped, tag = 'scoped memory for tpu_custom_call.1']
    #allocation8 [shape = 'u8[65536]{0}', space=vmem, size = 0x10000, scoped, tag = 'input window, operand 3']
    #allocation9 [shape = 'u8[32768]{0}', space=vmem, size = 0x8000, scoped, tag = 'input window, operand 5, single buffered']
    #allocation10 [shape = 'u8[8192]{0}', space=vmem, size = 0x2000, scoped, tag = 'output window, operand 0, single buffered']
    %12 = vsyncpa [#allocation4], 0
    %13 = vsyncpa [#allocation7], 0
    %14 = vsyncpa [#allocation5], 0
    loop: start=0, step=1, limit=12
    $region2: #{tpu_custom_call.1} parent=1 // loop_pre_header
      _
    $region3: #{tpu_custom_call.1} parent=1 // loop_header
      %s16 = sphi 0, %s20
      %p17 = scmp.ge.s32.totalorder %s16, 12
      %s23 = sphi 0, %s35
      %s24 = sphi 0, %s31
      %s25 = sphi 0, %s23
      %s26 = sphi 0, %s24
      %s27 = sphi 0, %s25
      %s28 = sphi 0, %s26
      %s38 = sphi 0, %s40
      %s41 = sphi 0, %s38
      %s42 = sphi 0, %s41
      %s58 = sphi 0, %s42
      %s62 = sphi 0, %s62
      %s64 = sphi 0, %s62
      %s65 = sphi 0, %s64
      %s79 = sphi 0, %s65
      %s83 = sphi 0, %s83
      %s85 = sphi 0, %s83
      %s86 = sphi 0, %s85
      %s100 = sphi 0, %s86
      %s106 = sphi 0, %s108
      %s109 = sphi 0, %s106
      %s110 = sphi 0, %s109
      %s126 = sphi 0, %s110
      %s130 = sphi 0, %s130
      %s132 = sphi 0, %s130
      %s133 = sphi 0, %s132
      %s147 = sphi 0, %s133
      %s151 = sphi 0, %s151
      %s153 = sphi 0, %s151
      %s154 = sphi 0, %s153
      %s168 = sphi 0, %s154
      %s172 = sphi 0, %s172
      %s174 = sphi 0, %s172
      %s175 = sphi 0, %s174
      %s189 = sphi 0, %s175
      %s195 = sphi 0, %s197
      %s198 = sphi 0, %s195
      %s199 = sphi 0, %s198
      %s215 = sphi 0, %s199
    $region4: #{tpu_custom_call.1} parent=1 // loop_header_branch
      %19 = sbr.rel (%p17) target = $region8
    $region5: #{tpu_custom_call.1} parent=1 // loop_body
      %s21 = ssub.s32 %s16, 1
      %s22 = ssub.s32 %s16, 2
      %s29 = sadd.s32 1, %s24
      %p30 = scmp.ge.s32.totalorder %s29, 10
      %s31 = scalar_select %p30, 0, %s29
      %s32 = sadd.s32 1, %s23
      %s33 = scalar_select %p30, %s32, %s23
      %p34 = scmp.ge.s32.totalorder %s33, 1
      %s35 = scalar_select %p34, 0, %s33
      %s36 = ssub.s32 %s23, %s35
      %p37 = scmp.eq.s32.totalorder %s36, 0
      %s39 = sadd.s32 %s38, 1
      %s40 = scalar_select %p37, %s38, %s39
      %p43 = pneg %p37
      %p44 = scmp.eq.s32.totalorder %s16, 9
      %p45 = por %p43, %p44
      %p46 = scmp.ne.s32.totalorder %s38, %s41
      %p47 = scmp.eq.s32.totalorder %s16, 0
      %p48 = por %p46, %p47
      %p49 = scmp.ne.s32.totalorder %s38, %s41
      %p50 = scmp.eq.s32.totalorder %s21, 9
      %p51 = por %p49, %p50
      %p52 = scmp.ne.s32.totalorder %s41, %s42
      %p53 = scmp.eq.s32.totalorder %s21, 0
      %p54 = por %p52, %p53
      %p55 = scmp.ne.s32.totalorder %s41, %s42
      %p56 = scmp.eq.s32.totalorder %s22, 9
      %p57 = por %p55, %p56
      %p59 = scmp.ne.s32.totalorder %s42, %s58
      %p60 = scmp.eq.s32.totalorder %s22, 0
      %p61 = por %p59, %p60
      %s63 = sadd.s32 %s62, 1
      %p66 = scmp.eq.s32.totalorder %s16, 9
      %p67 = scmp.ne.s32.totalorder %s62, %s64
      %p68 = scmp.eq.s32.totalorder %s16, 0
      %p69 = por %p67, %p68
      %p70 = scmp.ne.s32.totalorder %s62, %s64
      %p71 = scmp.eq.s32.totalorder %s21, 9
      %p72 = por %p70, %p71
      %p73 = scmp.ne.s32.totalorder %s64, %s65
      %p74 = scmp.eq.s32.totalorder %s21, 0
      %p75 = por %p73, %p74
      %p76 = scmp.ne.s32.totalorder %s64, %s65
      %p77 = scmp.eq.s32.totalorder %s22, 9
      %p78 = por %p76, %p77
      %p80 = scmp.ne.s32.totalorder %s65, %s79
      %p81 = scmp.eq.s32.totalorder %s22, 0
      %p82 = por %p80, %p81
      %s84 = sadd.s32 %s83, 1
      %p87 = scmp.eq.s32.totalorder %s16, 9
      %p88 = scmp.ne.s32.totalorder %s83, %s85
      %p89 = scmp.eq.s32.totalorder %s16, 0
      %p90 = por %p88, %p89
      %p91 = scmp.ne.s32.totalorder %s83, %s85
      %p92 = scmp.eq.s32.totalorder %s21, 9
      %p93 = por %p91, %p92
      %p94 = scmp.ne.s32.totalorder %s85, %s86
      %p95 = scmp.eq.s32.totalorder %s21, 0
      %p96 = por %p94, %p95
      %p97 = scmp.ne.s32.totalorder %s85, %s86
      %p98 = scmp.eq.s32.totalorder %s22, 9
      %p99 = por %p97, %p98
      %p101 = scmp.ne.s32.totalorder %s86, %s100
      %p102 = scmp.eq.s32.totalorder %s22, 0
      %p103 = por %p101, %p102
      %s104 = ssub.s32 %s24, %s31
      %p105 = scmp.eq.s32.totalorder %s104, 0
      %s107 = sadd.s32 %s106, 1
      %s108 = scalar_select %p105, %s106, %s107
      %p111 = pneg %p105
      %p112 = scmp.eq.s32.totalorder %s16, 9
      %p113 = por %p111, %p112
      %p114 = scmp.ne.s32.totalorder %s106, %s109
      %p115 = scmp.eq.s32.totalorder %s16, 0
      %p116 = por %p114, %p115
      %p117 = scmp.ne.s32.totalorder %s106, %s109
      %p118 = scmp.eq.s32.totalorder %s21, 9
      %p119 = por %p117, %p118
      %p120 = scmp.ne.s32.totalorder %s109, %s110
      %p121 = scmp.eq.s32.totalorder %s21, 0
      %p122 = por %p120, %p121
      %p123 = scmp.ne.s32.totalorder %s109, %s110
      %p124 = scmp.eq.s32.totalorder %s22, 9
      %p125 = por %p123, %p124
      %p127 = scmp.ne.s32.totalorder %s110, %s126
      %p128 = scmp.eq.s32.totalorder %s22, 0
      %p129 = por %p127, %p128
      %s131 = sadd.s32 %s130, 1
      %p134 = scmp.eq.s32.totalorder %s16, 9
      %p135 = scmp.ne.s32.totalorder %s130, %s132
      %p136 = scmp.eq.s32.totalorder %s16, 0
      %p137 = por %p135, %p136
      %p138 = scmp.ne.s32.totalorder %s130, %s132
      %p139 = scmp.eq.s32.totalorder %s21, 9
      %p140 = por %p138, %p139
      %p141 = scmp.ne.s32.totalorder %s132, %s133
      %p142 = scmp.eq.s32.totalorder %s21, 0
      %p143 = por %p141, %p142
      %p144 = scmp.ne.s32.totalorder %s132, %s133
      %p145 = scmp.eq.s32.totalorder %s22, 9
      %p146 = por %p144, %p145
      %p148 = scmp.ne.s32.totalorder %s133, %s147
      %p149 = scmp.eq.s32.totalorder %s22, 0
      %p150 = por %p148, %p149
      %s152 = sadd.s32 %s151, 1
      %p155 = scmp.eq.s32.totalorder %s16, 9
      %p156 = scmp.ne.s32.totalorder %s151, %s153
      %p157 = scmp.eq.s32.totalorder %s16, 0
      %p158 = por %p156, %p157
      %p159 = scmp.ne.s32.totalorder %s151, %s153
      %p160 = scmp.eq.s32.totalorder %s21, 9
      %p161 = por %p159, %p160
      %p162 = scmp.ne.s32.totalorder %s153, %s154
      %p163 = scmp.eq.s32.totalorder %s21, 0
      %p164 = por %p162, %p163
      %p165 = scmp.ne.s32.totalorder %s153, %s154
      %p166 = scmp.eq.s32.totalorder %s22, 9
      %p167 = por %p165, %p166
      %p169 = scmp.ne.s32.totalorder %s154, %s168
      %p170 = scmp.eq.s32.totalorder %s22, 0
      %p171 = por %p169, %p170
      %s173 = sadd.s32 %s172, 1
      %p176 = scmp.eq.s32.totalorder %s16, 9
      %p177 = scmp.ne.s32.totalorder %s172, %s174
      %p178 = scmp.eq.s32.totalorder %s16, 0
      %p179 = por %p177, %p178
      %p180 = scmp.ne.s32.totalorder %s172, %s174
      %p181 = scmp.eq.s32.totalorder %s21, 9
      %p182 = por %p180, %p181
      %p183 = scmp.ne.s32.totalorder %s174, %s175
      %p184 = scmp.eq.s32.totalorder %s21, 0
      %p185 = por %p183, %p184
      %p186 = scmp.ne.s32.totalorder %s174, %s175
      %p187 = scmp.eq.s32.totalorder %s22, 9
      %p188 = por %p186, %p187
      %p190 = scmp.ne.s32.totalorder %s175, %s189
      %p191 = scmp.eq.s32.totalorder %s22, 0
      %p192 = por %p190, %p191
      %s193 = ssub.s32 %s23, %s35
      %p194 = scmp.eq.s32.totalorder %s193, 0
      %s196 = sadd.s32 %s195, 1
      %s197 = scalar_select %p194, %s195, %s196
      %p200 = pneg %p194
      %p201 = scmp.eq.s32.totalorder %s16, 9
      %p202 = por %p200, %p201
      %p203 = scmp.ne.s32.totalorder %s195, %s198
      %p204 = scmp.eq.s32.totalorder %s16, 0
      %p205 = por %p203, %p204
      %p206 = scmp.ne.s32.totalorder %s195, %s198
      %p207 = scmp.eq.s32.totalorder %s21, 9
      %p208 = por %p206, %p207
      %p209 = scmp.ne.s32.totalorder %s198, %s199
      %p210 = scmp.eq.s32.totalorder %s21, 0
      %p211 = por %p209, %p210
      %p212 = scmp.ne.s32.totalorder %s198, %s199
      %p213 = scmp.eq.s32.totalorder %s22, 9
      %p214 = por %p212, %p213
      %p216 = scmp.ne.s32.totalorder %s199, %s215
      %p217 = scmp.eq.s32.totalorder %s22, 0
      %p218 = por %p216, %p217
      %p219 = scmp.le.s32.totalorder 1, %s16
      %p220 = scmp.lt.s32.totalorder %s16, 11
      %p221 = pnand %p219, %p220
      %p222 = pneg %p221
      // Predicated region
      $region9: #{tpu_custom_call.1} parent=5 // pred_check
        _
      $region10: #{tpu_custom_call.1} parent=5 // pred_check_branch
        %224 = sbr.rel (%p221) target = $region12
      $region11: #{tpu_custom_call.1} parent=5 // pred_region
        %s225 = ssub.s32 %s16, 1
        // Predicated region
        $region13: #{tpu_custom_call.1} parent=11 // pred_check
          %p226 = pneg %p54
        $region14: #{tpu_custom_call.1} parent=11 // pred_check_branch
          %228 = sbr.rel (%p226) target = $region16
        $region15: #{tpu_custom_call.1} parent=11 // pred_region
          %s229 = smul.u32 2, %s25
          %s231 = ssub.s32 128, 128
          %232 = vsyncadd [#allocation4], %s231
          %s233 = smul.addr %s229, 64
          %s234 = scalar_lea.hbm %s0, %s233
          %s235 = sshll.u32 [#allocation3], 4
          %s236 = int_to_ptr.vmem [resolvable:$true] %s235
          %241 = dma.hbm_to_vmem [thread:$0]  %s234, 128, %s236, [#allocation4], 64, 64, 4
        $region16: #{tpu_custom_call.1} parent=11 // pred_fallthru
          _
        // Predicated region
        $region17: #{tpu_custom_call.1} parent=11 // pred_check
          %p242 = pneg %p75
        $region18: #{tpu_custom_call.1} parent=11 // pred_check_branch
          %244 = sbr.rel (%p242) target = $region20
        $region19: #{tpu_custom_call.1} parent=11 // pred_region
          %s246 = ssub.s32 1024, 1024
          %247 = vsyncadd [#allocation7], %s246
          %s248 = sshll.u32 [#allocation6], 4
          %s249 = int_to_ptr.vmem [resolvable:$true] %s248
          %254 = dma.hbm_to_vmem [thread:$0]  %s1, 1024, %s249, [#allocation7], 64, 64, 4
        $region20: #{tpu_custom_call.1} parent=11 // pred_fallthru
          _
        // Predicated region
        $region21: #{tpu_custom_call.1} parent=11 // pred_check
          %p255 = pneg %p96
        $region22: #{tpu_custom_call.1} parent=11 // pred_check_branch
          %257 = sbr.rel (%p255) target = $region24
        $region23: #{tpu_custom_call.1} parent=11 // pred_region
          _
        $region24: #{tpu_custom_call.1} parent=11 // pred_fallthru
          _
        // Predicated region
        $region25: #{tpu_custom_call.1} parent=11 // pred_check
          %p258 = pneg %p143
        $region26: #{tpu_custom_call.1} parent=11 // pred_check_branch
          %260 = sbr.rel (%p258) target = $region28
        $region27: #{tpu_custom_call.1} parent=11 // pred_region
          _
        $region28: #{tpu_custom_call.1} parent=11 // pred_fallthru
          _
        // Predicated region
        $region29: #{tpu_custom_call.1} parent=11 // pred_check
          %p261 = pneg %p164
        $region30: #{tpu_custom_call.1} parent=11 // pred_check_branch
          %263 = sbr.rel (%p261) target = $region32
        $region31: #{tpu_custom_call.1} parent=11 // pred_region
          %s265 = ssub.s32 1024, 1024
          %266 = vsyncadd [#allocation7], %s265
          %s267 = sshll.u32 [#allocation9], 4
          %s268 = int_to_ptr.vmem [resolvable:$true] %s267
          %273 = dma.hbm_to_vmem [thread:$0]  %s5, 1024, %s268, [#allocation7], 64, 64, 4
        $region32: #{tpu_custom_call.1} parent=11 // pred_fallthru
          _
        // Predicated region
        $region33: #{tpu_custom_call.1} parent=11 // pred_check
          %p274 = pneg %p185
        $region34: #{tpu_custom_call.1} parent=11 // pred_check_branch
          %276 = sbr.rel (%p274) target = $region36
        $region35: #{tpu_custom_call.1} parent=11 // pred_region
          _
        $region36: #{tpu_custom_call.1} parent=11 // pred_fallthru
          _
      $region12: #{tpu_custom_call.1} parent=5 // pred_fallthru
        _
      %p277 = scmp.lt.s32.totalorder %s16, 10
      // Predicated region
      $region37: #{tpu_custom_call.1} parent=5 // pred_check
        %p278 = pneg %p277
      $region38: #{tpu_custom_call.1} parent=5 // pred_check_branch
        %280 = sbr.rel (%p278) target = $region40
      $region39: #{tpu_custom_call.1} parent=5 // pred_region
        // Predicated region
        $region41: #{tpu_custom_call.1} parent=39 // pred_check
          %p281 = pneg %p116
        $region42: #{tpu_custom_call.1} parent=39 // pred_check_branch
          %283 = sbr.rel (%p281) target = $region44
        $region43: #{tpu_custom_call.1} parent=39 // pred_region
          %s284 = sand.u32 %s16, 1
          %s285 = scalar_lea.sflag [#allocation4], %s284
          %s286 = sand.u32 %s106, 1
          %s287 = smul.addr %s286, 64
          %s288 = scalar_lea.vmem [#allocation8], %s287
          %s290 = ssub.s32 1024, 1024
          %291 = vsyncadd %s285, %s290
          %s292 = smul.addr %s24, 16
          %s293 = smul.addr %s292, 64
          %s294 = scalar_lea.hbm %s3, %s293
          %s295 = sshll.u32 %s288, 4
          %s296 = int_to_ptr.vmem [resolvable:$true] %s295
          %301 = dma.hbm_to_vmem [thread:$0]  %s294, 1024, %s296, %s285, 64, 64, 4
        $region44: #{tpu_custom_call.1} parent=39 // pred_fallthru
          _
      $region40: #{tpu_custom_call.1} parent=5 // pred_fallthru
        _
      %p302 = scmp.le.s32.totalorder 1, %s16
      %p303 = scmp.lt.s32.totalorder %s16, 11
      %p304 = pnand %p302, %p303
      %p305 = pneg %p304
      // Predicated region
      $region45: #{tpu_custom_call.1} parent=5 // pred_check
        _
      $region46: #{tpu_custom_call.1} parent=5 // pred_check_branch
        %307 = sbr.rel (%p304) target = $region48
      $region47: #{tpu_custom_call.1} parent=5 // pred_region
        %s308 = ssub.s32 %s16, 1
        // Predicated region
        $region49: #{tpu_custom_call.1} parent=47 // pred_check
          %p309 = pneg %p54
        $region50: #{tpu_custom_call.1} parent=47 // pred_check_branch
          %311 = sbr.rel (%p309) target = $region52
        $region51: #{tpu_custom_call.1} parent=47 // pred_region
          %312 = dma.done [#allocation4], 128
        $region52: #{tpu_custom_call.1} parent=47 // pred_fallthru
          _
        // Predicated region
        $region53: #{tpu_custom_call.1} parent=47 // pred_check
          %p313 = pneg %p75
        $region54: #{tpu_custom_call.1} parent=47 // pred_check_branch
          %315 = sbr.rel (%p313) target = $region56
        $region55: #{tpu_custom_call.1} parent=47 // pred_region
          %316 = dma.done [#allocation7], 1024
        $region56: #{tpu_custom_call.1} parent=47 // pred_fallthru
          _
        %s317 = sand.u32 %s21, 1
        %s318 = scalar_lea.sflag [#allocation4], %s317
        %s319 = sand.u32 %s109, 1
        %s320 = smul.addr %s319, 64
        %s321 = scalar_lea.vmem [#allocation8], %s320
        // Predicated region
        $region57: #{tpu_custom_call.1} parent=47 // pred_check
          %p322 = pneg %p122
        $region58: #{tpu_custom_call.1} parent=47 // pred_check_branch
          %324 = sbr.rel (%p322) target = $region60
        $region59: #{tpu_custom_call.1} parent=47 // pred_region
          %325 = dma.done %s318, 1024
        $region60: #{tpu_custom_call.1} parent=47 // pred_fallthru
          _
        // Predicated region
        $region61: #{tpu_custom_call.1} parent=47 // pred_check
          %p326 = pneg %p164
        $region62: #{tpu_custom_call.1} parent=47 // pred_check_branch
          %328 = sbr.rel (%p326) target = $region64
        $region63: #{tpu_custom_call.1} parent=47 // pred_region
          %329 = dma.done [#allocation7], 1024
        $region64: #{tpu_custom_call.1} parent=47 // pred_fallthru
          _
        %p330 = pneg %p54
        %p331 = pneg %p51
        %p332 = pneg %p75
        %p333 = pneg %p72
        %p334 = pneg %p96
        %p335 = pneg %p93
        %s336 = sand.u32 %s21, 1
        %s337 = scalar_lea.sflag [#allocation4], %s336
        %s338 = sand.u32 %s109, 1
        %s339 = smul.addr %s338, 64
        %s340 = scalar_lea.vmem [#allocation8], %s339
        %p341 = pneg %p122
        %p342 = pneg %p119
        %p343 = pneg %p143
        %p344 = pneg %p140
        %p345 = pneg %p164
        %p346 = pneg %p161
        %p347 = pneg %p185
        %p348 = pneg %p182
        %p349 = pneg %p211
        %p350 = pneg %p208
        %s351 = smul.u32 2, %s25
        %s352 = smul.u32 2, %s25
        %p354 = scmp.eq.s32.totalorder %s26, 0
        // Predicated region
        $region65: #{tpu_custom_call.1} parent=47 // pred_check
          %p355 = pneg %p354
        $region66: #{tpu_custom_call.1} parent=47 // pred_check_branch
          %357 = sbr.rel (%p355) target = $region68
        $region67: #{tpu_custom_call.1} parent=47 // pred_region
          %v358 = vld [vmem:[#allocation3] sm:$0xf]
          %v359 = vld [vmem:[#allocation3 + $0x4] sm:$0xf]
          %v360 = vld [vmem:[#allocation6] sm:$0xf]
          %v361 = vld [vmem:[#allocation6 + $0x4] sm:$0xf]
          %v362 = vld [vmem:[#allocation6 + $0x8] sm:$0xf]
          %v363 = vld [vmem:[#allocation6 + $0xc] sm:$0xf]
          %v364 = vld [vmem:[#allocation6 + $0x10] sm:$0xf]
          %v365 = vld [vmem:[#allocation6 + $0x14] sm:$0xf]
          %v366 = vld [vmem:[#allocation6 + $0x18] sm:$0xf]
          %v367 = vld [vmem:[#allocation6 + $0x1c] sm:$0xf]
          %v368 = vld [vmem:[#allocation6 + $0x20] sm:$0xf]
          %v369 = vld [vmem:[#allocation6 + $0x24] sm:$0xf]
          %v370 = vld [vmem:[#allocation6 + $0x28] sm:$0xf]
          %v371 = vld [vmem:[#allocation6 + $0x2c] sm:$0xf]
          %v372 = vld [vmem:[#allocation6 + $0x30] sm:$0xf]
          %v373 = vld [vmem:[#allocation6 + $0x34] sm:$0xf]
          %v374 = vld [vmem:[#allocation6 + $0x38] sm:$0xf]
          %v375 = vld [vmem:[#allocation6 + $0x3c] sm:$0xf]
          %v376 = vld [vmem:[%s2] sm:$0x1]
          %v378 = vlaneseq
          %v379 = vshrl.u32 %v378, 7
          %v380 = vsub.s32 0, %v379
          %v381 = vrot.slane %v376, %v380
          %v385 = vunpack.c.l.b16 %v358
          %v386 = vunpack.c.l.b16 %v359
          %v387 = vpack.c.b16 %v386, %v385
          %v405 = vunpack.c.l.b16 %v360
          %v406 = vunpack.c.l.b16 %v361
          %v407 = vunpack.c.l.b16 %v362
          %v408 = vunpack.c.l.b16 %v363
          %v409 = vunpack.c.l.b16 %v364
          %v410 = vunpack.c.l.b16 %v365
          %v411 = vunpack.c.l.b16 %v366
          %v412 = vunpack.c.l.b16 %v367
          %v413 = vunpack.c.l.b16 %v368
          %v414 = vunpack.c.l.b16 %v369
          %v415 = vunpack.c.l.b16 %v370
          %v416 = vunpack.c.l.b16 %v371
          %v417 = vunpack.c.l.b16 %v372
          %v418 = vunpack.c.l.b16 %v373
          %v419 = vunpack.c.l.b16 %v374
          %v420 = vunpack.c.l.b16 %v375
          %v421 = vpack.c.b16 %v406, %v405
          %v422 = vpack.c.b16 %v408, %v407
          %v423 = vpack.c.b16 %v410, %v409
          %v424 = vpack.c.b16 %v412, %v411
          %v425 = vpack.c.b16 %v414, %v413
          %v426 = vpack.c.b16 %v416, %v415
          %v427 = vpack.c.b16 %v418, %v417
          %v428 = vpack.c.b16 %v420, %v419
          %437 = vmatprep.subr.bf16.mxu0 0
          %438 = vmatpush1.bf16.msra.mxu0 %v421
          %439 = vmatprep.subr.bf16.mxu0 0
          %440 = vmatpush1.bf16.msra.mxu0 %v422
          %441 = vmatprep.subr.bf16.mxu0 0
          %442 = vmatpush1.bf16.msra.mxu0 %v423
          %443 = vmatprep.subr.bf16.mxu0 0
          %444 = vmatpush1.bf16.msra.mxu0 %v424
          %445 = vmatprep.subr.bf16.mxu0 0
          %446 = vmatpush1.bf16.msra.mxu0 %v425
          %447 = vmatprep.subr.bf16.mxu0 0
          %448 = vmatpush1.bf16.msra.mxu0 %v426
          %449 = vmatprep.subr.bf16.mxu0 0
          %450 = vmatpush1.bf16.msra.mxu0 %v427
          %451 = vmatprep.subr.bf16.mxu0 0
          %452 = vmatpush1.bf16.msra.mxu0 %v428
          %453 = vmatprep.subr.bf16.mxu0 0
          %454 = vmatpush1.bf16.msra.mxu0 0
          %455 = vmatprep.subr.bf16.mxu0 0
          %456 = vmatpush1.bf16.msra.mxu0 0
          %457 = vmatprep.subr.bf16.mxu0 0
          %458 = vmatpush1.bf16.msra.mxu0 0
          %459 = vmatprep.subr.bf16.mxu0 0
          %460 = vmatpush1.bf16.msra.mxu0 0
          %461 = vmatprep.subr.bf16.mxu0 0
          %462 = vmatpush1.bf16.msra.mxu0 0
          %463 = vmatprep.subr.bf16.mxu0 0
          %464 = vmatpush1.bf16.msra.mxu0 0
          %465 = vmatprep.subr.bf16.mxu0 0
          %466 = vmatpush1.bf16.msra.mxu0 0
          %467 = vmatprep.subr.bf16.mxu0 0
          %468 = vmatpush1.bf16.msra.mxu0 0
          %469 = vmatprep.mubr.bf16.mxu0 0
          %470 = vmatmul.mubr.bf16.gmra.mrb[0].mxu0 %v387
          %v471 = vpop.f32.mrb[0].mxu0
          %v472 = vadd.f32 %v381, %v471
          %v473 = vpop.f32.mrb[0].mxu0
          %v474 = vpop.f32.mrb[0].mxu0
          %v475 = vadd.f32 %v381, %v474
          %v476 = vpop.f32.mrb[0].mxu0
          %477 = vdwg.mxu0
          %v478 = vmax.f32 %v472, 0.0
          %v479 = vmax.f32 %v475, 0.0
          %480 = vst [vmem:[#allocation2] sm:$0xff] %v478
          %481 = vst [vmem:[#allocation2 + $0x8] sm:$0xff] %v479
        $region68: #{tpu_custom_call.1} parent=47 // pred_fallthru
          _
        %v482 = vld [vmem:[%s321] sm:$0xf]
        %v483 = vld [vmem:[%s321 + $0x4] sm:$0xf]
        %v484 = vld [vmem:[%s321 + $0x8] sm:$0xf]
        %v485 = vld [vmem:[%s321 + $0xc] sm:$0xf]
        %v486 = vld [vmem:[%s321 + $0x10] sm:$0xf]
        %v487 = vld [vmem:[%s321 + $0x14] sm:$0xf]
        %v488 = vld [vmem:[%s321 + $0x18] sm:$0xf]
        %v489 = vld [vmem:[%s321 + $0x1c] sm:$0xf]
        %v490 = vld [vmem:[%s321 + $0x20] sm:$0xf]
        %v491 = vld [vmem:[%s321 + $0x24] sm:$0xf]
        %v492 = vld [vmem:[%s321 + $0x28] sm:$0xf]
        %v493 = vld [vmem:[%s321 + $0x2c] sm:$0xf]
        %v494 = vld [vmem:[%s321 + $0x30] sm:$0xf]
        %v495 = vld [vmem:[%s321 + $0x34] sm:$0xf]
        %v496 = vld [vmem:[%s321 + $0x38] sm:$0xf]
        %v497 = vld [vmem:[%s321 + $0x3c] sm:$0xf]
        %s498 = scalar_lea.vmem %s4, %s26
        %v499 = vld [vmem:[%s498] sm:$0x1]
        %v500 = vld [vmem:[#allocation2] sm:$0xff]
        %v501 = vld [vmem:[#allocation2 + $0x8] sm:$0xff]
        %v502 = vpack.c.bf16 %v501, %v500
        %v504 = vlaneseq
        %v505 = vshrl.u32 %v504, 7
        %v506 = vsub.s32 0, %v505
        %v507 = vrot.slane %v499, %v506
        %v525 = vunpack.c.l.b16 %v482
        %v526 = vunpack.c.l.b16 %v483
        %v527 = vunpack.c.l.b16 %v484
        %v528 = vunpack.c.l.b16 %v485
        %v529 = vunpack.c.l.b16 %v486
        %v530 = vunpack.c.l.b16 %v487
        %v531 = vunpack.c.l.b16 %v488
        %v532 = vunpack.c.l.b16 %v489
        %v533 = vunpack.c.l.b16 %v490
        %v534 = vunpack.c.l.b16 %v491
        %v535 = vunpack.c.l.b16 %v492
        %v536 = vunpack.c.l.b16 %v493
        %v537 = vunpack.c.l.b16 %v494
        %v538 = vunpack.c.l.b16 %v495
        %v539 = vunpack.c.l.b16 %v496
        %v540 = vunpack.c.l.b16 %v497
        %v541 = vpack.c.b16 %v526, %v525
        %v542 = vpack.c.b16 %v528, %v527
        %v543 = vpack.c.b16 %v530, %v529
        %v544 = vpack.c.b16 %v532, %v531
        %v545 = vpack.c.b16 %v534, %v533
        %v546 = vpack.c.b16 %v536, %v535
        %v547 = vpack.c.b16 %v538, %v537
        %v548 = vpack.c.b16 %v540, %v539
        %557 = vmatprep.subr.bf16.mxu0 0
        %558 = vmatpush1.bf16.msra.mxu0 %v541
        %559 = vmatprep.subr.bf16.mxu0 0
        %560 = vmatpush1.bf16.msra.mxu0 %v542
        %561 = vmatprep.subr.bf16.mxu0 0
        %562 = vmatpush1.bf16.msra.mxu0 %v543
        %563 = vmatprep.subr.bf16.mxu0 0
        %564 = vmatpush1.bf16.msra.mxu0 %v544
        %565 = vmatprep.subr.bf16.mxu0 0
        %566 = vmatpush1.bf16.msra.mxu0 %v545
        %567 = vmatprep.subr.bf16.mxu0 0
        %568 = vmatpush1.bf16.msra.mxu0 %v546
        %569 = vmatprep.subr.bf16.mxu0 0
        %570 = vmatpush1.bf16.msra.mxu0 %v547
        %571 = vmatprep.subr.bf16.mxu0 0
        %572 = vmatpush1.bf16.msra.mxu0 %v548
        %573 = vmatprep.subr.bf16.mxu0 0
        %574 = vmatpush1.bf16.msra.mxu0 0
        %575 = vmatprep.subr.bf16.mxu0 0
        %576 = vmatpush1.bf16.msra.mxu0 0
        %577 = vmatprep.subr.bf16.mxu0 0
        %578 = vmatpush1.bf16.msra.mxu0 0
        %579 = vmatprep.subr.bf16.mxu0 0
        %580 = vmatpush1.bf16.msra.mxu0 0
        %581 = vmatprep.subr.bf16.mxu0 0
        %582 = vmatpush1.bf16.msra.mxu0 0
        %583 = vmatprep.subr.bf16.mxu0 0
        %584 = vmatpush1.bf16.msra.mxu0 0
        %585 = vmatprep.subr.bf16.mxu0 0
        %586 = vmatpush1.bf16.msra.mxu0 0
        %587 = vmatprep.subr.bf16.mxu0 0
        %588 = vmatpush1.bf16.msra.mxu0 0
        %589 = vmatprep.mubr.bf16.mxu0 0
        %590 = vmatmul.mubr.bf16.gmra.mrb[0].mxu0 %v502
        %v591 = vpop.f32.mrb[0].mxu0
        %v592 = vadd.f32 %v507, %v591
        %v593 = vpop.f32.mrb[0].mxu0
        %v594 = vpop.f32.mrb[0].mxu0
        %v595 = vadd.f32 %v507, %v594
        %v596 = vpop.f32.mrb[0].mxu0
        %597 = vdwg.mxu0
        %v598 = vmax.f32 %v592, 0.0
        %v599 = vmax.f32 %v595, 0.0
        %600 = vst [vmem:[#allocation2] sm:$0xff] %v598
        %601 = vst [vmem:[#allocation2 + $0x8] sm:$0xff] %v599
        %p602 = scmp.eq.s32.totalorder %s26, 9
        // Predicated region
        $region69: #{tpu_custom_call.1} parent=47 // pred_check
          %p603 = pneg %p602
        $region70: #{tpu_custom_call.1} parent=47 // pred_check_branch
          %605 = sbr.rel (%p603) target = $region72
        $region71: #{tpu_custom_call.1} parent=47 // pred_region
          %v606 = vld [vmem:[#allocation9] sm:$0xf]
          %v607 = vld [vmem:[#allocation9 + $0x4] sm:$0xf]
          %v608 = vld [vmem:[#allocation9 + $0x8] sm:$0xf]
          %v609 = vld [vmem:[#allocation9 + $0xc] sm:$0xf]
          %v610 = vld [vmem:[#allocation9 + $0x10] sm:$0xf]
          %v611 = vld [vmem:[#allocation9 + $0x14] sm:$0xf]
          %v612 = vld [vmem:[#allocation9 + $0x18] sm:$0xf]
          %v613 = vld [vmem:[#allocation9 + $0x1c] sm:$0xf]
          %v614 = vld [vmem:[#allocation9 + $0x20] sm:$0xf]
          %v615 = vld [vmem:[#allocation9 + $0x24] sm:$0xf]
          %v616 = vld [vmem:[#allocation9 + $0x28] sm:$0xf]
          %v617 = vld [vmem:[#allocation9 + $0x2c] sm:$0xf]
          %v618 = vld [vmem:[#allocation9 + $0x30] sm:$0xf]
          %v619 = vld [vmem:[#allocation9 + $0x34] sm:$0xf]
          %v620 = vld [vmem:[#allocation9 + $0x38] sm:$0xf]
          %v621 = vld [vmem:[#allocation9 + $0x3c] sm:$0xf]
          %v622 = vld [vmem:[#allocation2] sm:$0xff]
          %v623 = vld [vmem:[#allocation2 + $0x8] sm:$0xff]
          %v624 = vpack.c.bf16 %v623, %v622
          %v625 = vld [vmem:[%s6] sm:$0x1]
          %v627 = vlaneseq
          %v628 = vshrl.u32 %v627, 7
          %v629 = vsub.s32 0, %v628
          %v630 = vrot.slane %v625, %v629
          %v648 = vunpack.c.l.b16 %v606
          %v649 = vunpack.c.l.b16 %v607
          %v650 = vunpack.c.l.b16 %v608
          %v651 = vunpack.c.l.b16 %v609
          %v652 = vunpack.c.l.b16 %v610
          %v653 = vunpack.c.l.b16 %v611
          %v654 = vunpack.c.l.b16 %v612
          %v655 = vunpack.c.l.b16 %v613
          %v656 = vunpack.c.l.b16 %v614
          %v657 = vunpack.c.l.b16 %v615
          %v658 = vunpack.c.l.b16 %v616
          %v659 = vunpack.c.l.b16 %v617
          %v660 = vunpack.c.l.b16 %v618
          %v661 = vunpack.c.l.b16 %v619
          %v662 = vunpack.c.l.b16 %v620
          %v663 = vunpack.c.l.b16 %v621
          %v664 = vpack.c.b16 %v649, %v648
          %v665 = vpack.c.b16 %v651, %v650
          %v666 = vpack.c.b16 %v653, %v652
          %v667 = vpack.c.b16 %v655, %v654
          %v668 = vpack.c.b16 %v657, %v656
          %v669 = vpack.c.b16 %v659, %v658
          %v670 = vpack.c.b16 %v661, %v660
          %v671 = vpack.c.b16 %v663, %v662
          %680 = vmatprep.subr.bf16.mxu0 0
          %681 = vmatpush1.bf16.msra.mxu0 %v664
          %682 = vmatprep.subr.bf16.mxu0 0
          %683 = vmatpush1.bf16.msra.mxu0 %v665
          %684 = vmatprep.subr.bf16.mxu0 0
          %685 = vmatpush1.bf16.msra.mxu0 %v666
          %686 = vmatprep.subr.bf16.mxu0 0
          %687 = vmatpush1.bf16.msra.mxu0 %v667
          %688 = vmatprep.subr.bf16.mxu0 0
          %689 = vmatpush1.bf16.msra.mxu0 %v668
          %690 = vmatprep.subr.bf16.mxu0 0
          %691 = vmatpush1.bf16.msra.mxu0 %v669
          %692 = vmatprep.subr.bf16.mxu0 0
          %693 = vmatpush1.bf16.msra.mxu0 %v670
          %694 = vmatprep.subr.bf16.mxu0 0
          %695 = vmatpush1.bf16.msra.mxu0 %v671
          %696 = vmatprep.subr.bf16.mxu0 0
          %697 = vmatpush1.bf16.msra.mxu0 0
          %698 = vmatprep.subr.bf16.mxu0 0
          %699 = vmatpush1.bf16.msra.mxu0 0
          %700 = vmatprep.subr.bf16.mxu0 0
          %701 = vmatpush1.bf16.msra.mxu0 0
          %702 = vmatprep.subr.bf16.mxu0 0
          %703 = vmatpush1.bf16.msra.mxu0 0
          %704 = vmatprep.subr.bf16.mxu0 0
          %705 = vmatpush1.bf16.msra.mxu0 0
          %706 = vmatprep.subr.bf16.mxu0 0
          %707 = vmatpush1.bf16.msra.mxu0 0
          %708 = vmatprep.subr.bf16.mxu0 0
          %709 = vmatpush1.bf16.msra.mxu0 0
          %710 = vmatprep.subr.bf16.mxu0 0
          %711 = vmatpush1.bf16.msra.mxu0 0
          %712 = vmatprep.mubr.bf16.mxu0 0
          %713 = vmatmul.mubr.bf16.gmra.mrb[0].mxu0 %v624
          %v714 = vpop.f32.mrb[0].mxu0
          %v715 = vadd.f32 %v630, %v714
          %v716 = vpop.f32.mrb[0].mxu0
          %v717 = vpop.f32.mrb[0].mxu0
          %v718 = vadd.f32 %v630, %v717
          %v719 = vpop.f32.mrb[0].mxu0
          %720 = vdwg.mxu0
          %v721 = vlaneseq
          %v722 = vand.u32 %v721, 127
          %vm723 = vcmp.eq.s32.totalorder %v722, 8
          %v724 = vtanh.pop %v715
          %v725 = vtanh.pop %v718
          %v726 = vsel %vm723, %v724, %v715
          %v727 = vsel %vm723, %v725, %v718
          %728 = vst [vmem:[#allocation10] sm:$0xff] %v726
          %729 = vst [vmem:[#allocation10 + $0x8] sm:$0xff] %v727
        $region72: #{tpu_custom_call.1} parent=47 // pred_fallthru
          _
        // Predicated region
        $region73: #{tpu_custom_call.1} parent=47 // pred_check
          %p730 = pneg %p208
        $region74: #{tpu_custom_call.1} parent=47 // pred_check_branch
          %732 = sbr.rel (%p730) target = $region76
        $region75: #{tpu_custom_call.1} parent=47 // pred_region
          %s733 = smul.u32 2, %s25
          %s735 = ssub.s32 256, 256
          %736 = vsyncadd [#allocation5], %s735
          %s737 = smul.addr %s733, 128
          %s738 = scalar_lea.hbm %s7, %s737
          %s739 = sshll.u32 [#allocation10], 4
          %s740 = int_to_ptr.vmem [resolvable:$true] %s739
          %745 = dma.vmem_to_hbm [thread:$0]  %s740, 256, %s738, [#allocation5], 128, 128, 8
        $region76: #{tpu_custom_call.1} parent=47 // pred_fallthru
          _
        // Predicated region
        $region77: #{tpu_custom_call.1} parent=47 // pred_check
          %p746 = pneg %p208
        $region78: #{tpu_custom_call.1} parent=47 // pred_check_branch
          %748 = sbr.rel (%p746) target = $region80
        $region79: #{tpu_custom_call.1} parent=47 // pred_region
          %749 = dma.done [#allocation5], 256
        $region80: #{tpu_custom_call.1} parent=47 // pred_fallthru
          _
      $region48: #{tpu_custom_call.1} parent=5 // pred_fallthru
        _
      %p750 = scmp.le.s32.totalorder 2, %s16
      // Predicated region
      $region81: #{tpu_custom_call.1} parent=5 // pred_check
        %p751 = pneg %p750
      $region82: #{tpu_custom_call.1} parent=5 // pred_check_branch
        %753 = sbr.rel (%p751) target = $region84
      $region83: #{tpu_custom_call.1} parent=5 // pred_region
        %s754 = ssub.s32 %s16, 2
      $region84: #{tpu_custom_call.1} parent=5 // pred_fallthru
        _
    $region6: #{tpu_custom_call.1} parent=1 // loop_footer
      %s20 = sadd.s32 1, %s16
    $region7: #{tpu_custom_call.1} parent=1 // loop_footer_branch
      %15 = sbr.rel target = $region3
    $region8: #{tpu_custom_call.1} parent=1 // loop_exit
      _
    %755 = vsyncpa [#allocation4], 1
    %s756 = scalar_lea.sflag [#allocation4], 1
    %757 = vsyncpa %s756, 1
    %758 = vsyncpa [#allocation7], 1
    %759 = vsyncpa [#allocation5], 1
    %s760 = scalar_lea.sflag [#allocation5], 1
    %761 = vsyncpa %s760, 1

</llo_original>
